<compile_context>
chip_gen: v7x
topology: tpu7x:2x2x1
jax: 0.10.0
libtpu: 0.0.40
codegen_flags: <defaults>
</compile_context>

<pallas_src>
import functools
import math

import jax
import jax.numpy as jnp
from jax.experimental import pallas as pl
from jax.experimental.pallas import tpu as pltpu


# ---------------------------------------------------------------------------
# Kernel body
# ---------------------------------------------------------------------------
def _group_rms_norm_kernel(x_ref, gamma_ref, m_ref, mt_ref, o_ref, *,
                           inv_group_size, eps):
    # x_ref:     (tm, Hp)  tile of packed input rows
    # gamma_ref: (1,  Hp)  packed learnable scale (resident)
    # m_ref:     (Hp, Gp)  group indicator matrix (resident)
    # mt_ref:    (Gp, Hp)  its transpose (resident; avoids per-step XLU transpose)
    x = x_ref[...].astype(jnp.float32)          # promote to fp32 (matches .to(float32))
    m = m_ref[...]
    mt = mt_ref[...]

    # Per-group sum of squares via MXU: (tm, Hp) @ (Hp, Gp) -> (tm, Gp).
    # Skinny matmul (N=Gp) rides the vector-extended slot — free while mem-bound.
    sq_sum = jnp.dot(x * x, m, preferred_element_type=jnp.float32)
    rms = jax.lax.rsqrt(sq_sum * inv_group_size + eps)          # (tm, Gp), EUP

    # Broadcast group scale back to packed hidden width: (tm, Gp) @ (Gp, Hp).
    scale = jnp.dot(rms, mt, preferred_element_type=jnp.float32)

    gamma = gamma_ref[...].astype(jnp.float32)  # (1, Hp), broadcasts over rows
    o_ref[...] = (x * scale * gamma).astype(o_ref.dtype)


# ---------------------------------------------------------------------------
# Wrapper helpers
# ---------------------------------------------------------------------------
def _round_up(x, m):
    return ((x + m - 1) // m) * m


def _vmem_capacity_bytes():
    """Per-generation physical VMEM (v7x has 64 MiB per TC, v5e/v6e 128 MiB)."""
    try:
        kind = jax.devices()[0].device_kind.lower()
    except Exception:
        kind = ""
    if "7" in kind:
        return 64 * 1024 * 1024
    return 128 * 1024 * 1024


def _choose_row_tile(packed_rows, hp, gp, x_bytes, out_bytes, budget_bytes):
    """Largest power-of-two row tile whose block footprint fits the VMEM budget."""
    # Resident (fetched-once) blocks, double-buffered: gamma + M + M^T.
    fixed = 2 * (hp * 4 + 2 * hp * gp * 4)
    max_useful = max(8, _round_up(packed_rows, 8))
    for tm in (2048, 1024, 512, 256, 128, 64, 32, 16, 8):
        if tm > max_useful:
            continue
        # Double-buffered in/out tiles + ~2 fp32 working copies of the tile.
        need = fixed + tm * hp * (2 * x_bytes + 2 * out_bytes + 2 * 4)
        if need <= budget_bytes:
            return tm
    return 8


# ---------------------------------------------------------------------------
# Public entry point
# ---------------------------------------------------------------------------
def group_rms_norm(x, gamma, *, group_size, eps=1e-5, row_tile=None):
    """GroupRMSNorm forward.

    Args:
      x:     [batch, seq, hidden] array (any float dtype).
      gamma: [hidden] learnable scale.
      group_size: size of each normalization group (hidden % group_size == 0).
      row_tile: optional override of the packed-row tile size.
    Returns:
      [batch, seq, hidden] array with the same dtype as x.
    """
    b, s, h = x.shape
    assert h % group_size == 0, "hidden_size must be divisible by group_size"
    num_groups = h // group_size
    rows = b * s

    # --- Lane packing: make the last dim a multiple of 128 when h isn't. ---
    if h % 128 == 0:
        p = 1
    else:
        p = math.lcm(h, 128) // h
        if p * h > 1024:            # exotic h: packing would blow up the row width
            p = 1
    hp = p * h                       # packed hidden width (lane axis)
    gp = p * num_groups              # groups per packed row

    x_bytes = jnp.dtype(x.dtype).itemsize
    out_bytes = x_bytes

    capacity = _vmem_capacity_bytes()
    budget = capacity // 2                      # tile-footprint budget
    vmem_limit = (capacity * 3) // 4            # raise scoped VMEM limit (esp. v5e)

    packed_rows = pl.cdiv(rows, p)

    # --- Row tile selection ------------------------------------------------
    if row_tile is not None:
        tm = max(8, _round_up(int(row_tile), 8))
    else:
        tm = _choose_row_tile(packed_rows, hp, gp, x_bytes, out_bytes, budget)
    # Make sure both TensorCores / megacore get work when there is enough of it.
    if packed_rows >= 16 and pl.cdiv(packed_rows, tm) < 2:
        tm = max(8, _round_up(pl.cdiv(packed_rows, 2), 8))

    grid_m = pl.cdiv(packed_rows, tm)
    padded_rows = grid_m * tm * p

    # --- Pack / pad in plain JAX (no-op for round shapes) -------------------
    x2d = x.reshape(rows, h)
    if padded_rows != rows:
        x2d = jnp.pad(x2d, ((0, padded_rows - rows), (0, 0)))
    xp = x2d.reshape(padded_rows // p, hp)

    gamma_p = jnp.tile(gamma, p).reshape(1, hp)

    # Group indicator matrices, built once on host side (hoisted out of the
    # grid loop).  Packed column j belongs to packed group j // group_size.
    col_grp = jnp.arange(hp, dtype=jnp.int32) // group_size        # (hp,)
    grp_id = jnp.arange(gp, dtype=jnp.int32)                       # (gp,)
    m_mat = (col_grp[:, None] == grp_id[None, :]).astype(jnp.float32)   # (hp, gp)
    mt_mat = m_mat.T                                               # (gp, hp)

    kernel = functools.partial(
        _group_rms_norm_kernel,
        inv_group_size=1.0 / group_size,
        eps=eps,
    )

    out_p = pl.pallas_call(
        kernel,
        out_shape=jax.ShapeDtypeStruct((padded_rows // p, hp), x.dtype),
        grid_spec=pltpu.PrefetchScalarGridSpec(
            num_scalar_prefetch=0,
            grid=(grid_m,),
            in_specs=[
                pl.BlockSpec((tm, hp), lambda i: (i, 0)),   # x tile
                pl.BlockSpec((1, hp), lambda i: (0, 0)),    # gamma (resident)
                pl.BlockSpec((hp, gp), lambda i: (0, 0)),   # M (resident)
                pl.BlockSpec((gp, hp), lambda i: (0, 0)),   # M^T (resident)
            ],
            out_specs=pl.BlockSpec((tm, hp), lambda i: (i, 0)),
        ),
        compiler_params=pltpu.CompilerParams(
            dimension_semantics=("parallel",),
            vmem_limit_bytes=int(vmem_limit),
        ),
    )(xp, gamma_p, m_mat, mt_mat)

    out2d = out_p.reshape(padded_rows, h)[:rows]
    return out2d.reshape(b, s, h)


# ---------------------------------------------------------------------------
# Pure-JAX reference (mirrors the PyTorch forward exactly)
# ---------------------------------------------------------------------------
def group_rms_norm_reference(x, gamma, *, group_size, eps=1e-5):
    b, s, h = x.shape
    g = h // group_size
    xg = x.reshape(b, s, g, group_size).astype(jnp.float32)
    rms = jax.lax.rsqrt(jnp.mean(xg * xg, axis=-1, keepdims=True) + eps)
    normalized = xg * rms * gamma.reshape(1, 1, g, group_size).astype(jnp.float32)
    return normalized.reshape(b, s, h).astype(x.dtype)


if __name__ == "__main__":
    # --- Case 1: module config GroupRMSNorm(hidden_size=32, group_size=8) ---
    hidden_size, group_size, eps = 32, 8, 1e-5
    init_range, init_seed = (-1.0, 1.0), 42
    batch, seq = 2, 8

    # Deterministic parameter init (uniform in init_range) — synthetic, plays
    # the same role as torch.manual_seed + nn.init.uniform_.
    gamma = jax.random.uniform(
        jax.random.PRNGKey(init_seed), (hidden_size,), dtype=jnp.float32,
        minval=init_range[0], maxval=init_range[1],
    )
    x = jax.random.normal(jax.random.PRNGKey(0),
                          (batch, seq, hidden_size), dtype=jnp.float32)

    out = jax.block_until_ready(group_rms_norm(x, gamma, group_size=group_size, eps=eps))
    ref = group_rms_norm_reference(x, gamma, group_size=group_size, eps=eps)
    assert out.shape == (batch, seq, hidden_size)
    assert out.dtype == x.dtype
    assert jnp.allclose(out, ref, atol=1e-5, rtol=1e-5), "mismatch vs reference (fp32, packed path)"

    # --- Case 2: wider hidden (no lane-packing path), bf16 input -------------
    h2, gs2 = 256, 64
    gamma2 = jax.random.uniform(jax.random.PRNGKey(init_seed), (h2,),
                                dtype=jnp.float32, minval=-1.0, maxval=1.0)
    x2 = jax.random.normal(jax.random.PRNGKey(0), (2, 16, h2),
                           dtype=jnp.float32).astype(jnp.bfloat16)
    out2 = jax.block_until_ready(group_rms_norm(x2, gamma2, group_size=gs2, eps=eps))
    ref2 = group_rms_norm_reference(x2, gamma2, group_size=gs2, eps=eps)
    assert out2.dtype == x2.dtype
    assert jnp.allclose(out2.astype(jnp.float32), ref2.astype(jnp.float32),
                        atol=1e-2, rtol=1e-2), "mismatch vs reference (bf16 path)"

    print("KERNEL_OK")
</pallas_src>

<mosaic_0001>
module attributes {stable_mosaic.version = 11 : i64} {
  func.func @_group_rms_norm_kernel(%arg0: i32, %arg1: memref<8x128xf32, #tpu.memory_space<vmem>>, %arg2: memref<1x128xf32, #tpu.memory_space<vmem>>, %arg3: memref<128x16xf32, #tpu.memory_space<vmem>>, %arg4: memref<16x128xf32, #tpu.memory_space<vmem>>, %arg5: memref<8x128xf32, #tpu.memory_space<vmem>>) attributes {dimension_semantics = [#tpu.dimension_semantics<parallel>], iteration_bounds = array<i64: 1>, scalar_prefetch = 0 : i64, scratch_operands = 0 : i64, tpu.core_type = #tpu.core_type<tc>, window_params = [{transform_indices = @transform_0, window_bounds = array<i64: 8, 128>}, {pipeline_mode = #tpu.pipeline_mode<synchronous>, transform_indices = @transform_1, window_bounds = array<i64: 1, 128>}, {pipeline_mode = #tpu.pipeline_mode<synchronous>, transform_indices = @transform_2, window_bounds = array<i64: 128, 16>}, {pipeline_mode = #tpu.pipeline_mode<synchronous>, transform_indices = @transform_3, window_bounds = array<i64: 16, 128>}, {transform_indices = @transform_4, window_bounds = array<i64: 8, 128>}]} {
    %c0 = arith.constant 0 : index
    %c0_0 = arith.constant 0 : index
    %0 = vector.load %arg1[%c0, %c0_0] : memref<8x128xf32, #tpu.memory_space<vmem>>, vector<8x128xf32>
    %c0_1 = arith.constant 0 : index
    %c0_2 = arith.constant 0 : index
    %1 = vector.load %arg3[%c0_1, %c0_2] : memref<128x16xf32, #tpu.memory_space<vmem>>, vector<128x16xf32>
    %c0_3 = arith.constant 0 : index
    %c0_4 = arith.constant 0 : index
    %2 = vector.load %arg4[%c0_3, %c0_4] : memref<16x128xf32, #tpu.memory_space<vmem>>, vector<16x128xf32>
    %3 = arith.mulf %0, %0 : vector<8x128xf32>
    %cst = arith.constant dense<0.000000e+00> : vector<8x16xf32>
    %4 = tpu.matmul %3, %1, %cst {dimension_numbers = #tpu.dot_dimension_numbers<[1], [0], [0], [1], [0, 0, 1, 1], [], []>} : vector<8x128xf32>, vector<128x16xf32>, vector<8x16xf32> -> vector<8x16xf32>
    %cst_5 = arith.constant 1.250000e-01 : f32
    %5 = vector.broadcast %cst_5 : f32 to vector<8x16xf32>
    %6 = arith.mulf %4, %5 : vector<8x16xf32>
    %cst_6 = arith.constant 9.99999974E-6 : f32
    %7 = vector.broadcast %cst_6 : f32 to vector<8x16xf32>
    %8 = arith.addf %6, %7 : vector<8x16xf32>
    %9 = math.rsqrt %8 : vector<8x16xf32>
    %cst_7 = arith.constant dense<0.000000e+00> : vector<8x128xf32>
    %10 = tpu.matmul %9, %2, %cst_7 {dimension_numbers = #tpu.dot_dimension_numbers<[1], [0], [0], [1], [0, 0, 1, 1], [], []>} : vector<8x16xf32>, vector<16x128xf32>, vector<8x128xf32> -> vector<8x128xf32>
    %c0_8 = arith.constant 0 : index
    %c0_9 = arith.constant 0 : index
    %11 = vector.load %arg2[%c0_8, %c0_9] : memref<1x128xf32, #tpu.memory_space<vmem>>, vector<1x128xf32>
    %12 = arith.mulf %0, %10 : vector<8x128xf32>
    %13 = vector.broadcast %11 : vector<1x128xf32> to vector<8x128xf32>
    %14 = arith.mulf %12, %13 : vector<8x128xf32>
    %c0_10 = arith.constant 0 : index
    %c0_11 = arith.constant 0 : index
    %15 = vector.load %arg5[%c0_10, %c0_11] : memref<8x128xf32, #tpu.memory_space<vmem>>, vector<8x128xf32>
    tpu.vector_store %arg5[%c0_10, %c0_11], %14 {strides = array<i32>} : memref<8x128xf32, #tpu.memory_space<vmem>>, vector<8x128xf32>,
    return
  }
  func.func @transform_0(%arg0: i32) -> (i32, i32) {
    %c0_i32 = arith.constant 0 : i32
    %c0_i32_0 = arith.constant 0 : i32
    return %arg0, %c0_i32 : i32, i32
  }
  func.func @transform_1(%arg0: i32) -> (i32, i32) {
    %c0_i32 = arith.constant 0 : i32
    %c0_i32_0 = arith.constant 0 : i32
    %c0_i32_1 = arith.constant 0 : i32
    return %c0_i32, %c0_i32_0 : i32, i32
  }
  func.func @transform_2(%arg0: i32) -> (i32, i32) {
    %c0_i32 = arith.constant 0 : i32
    %c0_i32_0 = arith.constant 0 : i32
    %c0_i32_1 = arith.constant 0 : i32
    return %c0_i32, %c0_i32_0 : i32, i32
  }
  func.func @transform_3(%arg0: i32) -> (i32, i32) {
    %c0_i32 = arith.constant 0 : i32
    %c0_i32_0 = arith.constant 0 : i32
    %c0_i32_1 = arith.constant 0 : i32
    return %c0_i32, %c0_i32_0 : i32, i32
  }
  func.func @transform_4(%arg0: i32) -> (i32, i32) {
    %c0_i32 = arith.constant 0 : i32
    %c0_i32_0 = arith.constant 0 : i32
    return %arg0, %c0_i32 : i32, i32
  }
}

</mosaic_0001>

<llo_original>
// kernel: tpu_custom_call.1
$region0: #{tpu_custom_call.1}
  #allocation0 [shape = 'u32[]', space=smem, size = 0x4, offset = 0x4, fixed_abs, tag = 'smem constant byte address 0x4 - core index']
  #allocation1 [shape = 'u32[144,128]{1,0:T(1,128)}', space=vmem, size = 0x12000, scoped, tag = 'internal scratch']
  %s0 = inlined_call_operand.hbm [shape: f32[8,128], index: 0, kind: input, shape index: {}]
  %s1 = inlined_call_operand.hbm [shape: f32[1,128], index: 1, kind: input, shape index: {}]
  %s2 = inlined_call_operand.hbm [shape: f32[128,16], index: 2, kind: input, shape index: {}]
  %s3 = inlined_call_operand.hbm [shape: f32[16,128], index: 3, kind: input, shape index: {}]
  %s4 = inlined_call_operand.hbm [shape: f32[8,128], index: 4, kind: output, shape index: {}]
  %s5 = sld [smem:[#allocation0]]
  $region42: #{tpu_custom_call.1} parent=0
    _
  %s7 = ssub.s32 1, %s5
  %s8 = scalar_select 0, %s7, %s5
  $region1: #{tpu_custom_call.1} parent=0
    #allocation2 [shape = 'u8[4096]{0}', space=vmem, size = 0x1000, scoped, tag = 'input window, operand 0, single buffered']
    #allocation3 [shape = 's32[1]{0}', space=sflag, size = 0x4, scoped, tag = 'scoped memory for tpu_custom_call.1']
    #allocation4 [shape = 's32[1]{0}', space=sflag, size = 0x4, scoped, tag = 'scoped memory for tpu_custom_call.1']
    #allocation5 [shape = 'u8[512]{0}', space=vmem, size = 0x400, scoped, tag = 'input window, operand 1, single buffered']
    #allocation6 [shape = 's32[1]{0}', space=sflag, size = 0x4, scoped, tag = 'scoped memory for tpu_custom_call.1']
    #allocation7 [shape = 'u8[65536]{0}', space=vmem, size = 0x10000, scoped, tag = 'input window, operand 2, single buffered']
    #allocation8 [shape = 'u8[8192]{0}', space=vmem, size = 0x2000, scoped, tag = 'input window, operand 3, single buffered']
    #allocation9 [shape = 's32[1]{0}', space=sflag, size = 0x4, scoped, tag = 'scoped memory for tpu_custom_call.1']
    #allocation10 [shape = 'u8[4096]{0}', space=vmem, size = 0x1000, scoped, tag = 'output window, operand 0, single buffered']
    %9 = vsyncpa [#allocation3], 0
    %10 = vsyncpa [#allocation6], 0
    %11 = vsyncpa [#allocation9], 0
    %12 = vsyncpa [#allocation4], 0
    // Predicated region
    $region2: #{tpu_custom_call.1} parent=1 // pred_check
      _
    $region3: #{tpu_custom_call.1} parent=1 // pred_check_branch
      %14 = sbr.rel (0) target = $region5
    $region4: #{tpu_custom_call.1} parent=1 // pred_region
      %s16 = ssub.s32 128, 128
      %17 = vsyncadd [#allocation3], %s16
      %s19 = sshll.u32 [#allocation2], 4
      %s20 = int_to_ptr.vmem [resolvable:$true] %s19
      %22 = dma.hbm_to_vmem [thread:$0]  %s0, 128, %s20, [#allocation3]
    $region5: #{tpu_custom_call.1} parent=1 // pred_fallthru
      _
    // Predicated region
    $region6: #{tpu_custom_call.1} parent=1 // pred_check
      _
    $region7: #{tpu_custom_call.1} parent=1 // pred_check_branch
      %24 = sbr.rel (0) target = $region9
    $region8: #{tpu_custom_call.1} parent=1 // pred_region
      %s26 = ssub.s32 16, 16
      %27 = vsyncadd [#allocation6], %s26
      %s29 = sshll.u32 [#allocation5], 4
      %s30 = int_to_ptr.vmem [resolvable:$true] %s29
      %32 = dma.hbm_to_vmem [thread:$0]  %s1, 16, %s30, [#allocation6]
    $region9: #{tpu_custom_call.1} parent=1 // pred_fallthru
      _
    // Predicated region
    $region10: #{tpu_custom_call.1} parent=1 // pred_check
      _
    $region11: #{tpu_custom_call.1} parent=1 // pred_check_branch
      %34 = sbr.rel (0) target = $region13
    $region12: #{tpu_custom_call.1} parent=1 // pred_region
      %s36 = ssub.s32 2048, 2048
      %37 = vsyncadd [#allocation6], %s36
      %s38 = sshll.u32 [#allocation7], 4
      %s39 = int_to_ptr.vmem [resolvable:$true] %s38
      %44 = dma.hbm_to_vmem [thread:$0]  %s2, 2048, %s39, [#allocation6], 128, 128, 8
    $region13: #{tpu_custom_call.1} parent=1 // pred_fallthru
      _
    // Predicated region
    $region14: #{tpu_custom_call.1} parent=1 // pred_check
      _
    $region15: #{tpu_custom_call.1} parent=1 // pred_check_branch
      %46 = sbr.rel (0) target = $region17
    $region16: #{tpu_custom_call.1} parent=1 // pred_region
      %s48 = ssub.s32 256, 256
      %49 = vsyncadd [#allocation9], %s48
      %s50 = sshll.u32 [#allocation8], 4
      %s51 = int_to_ptr.vmem [resolvable:$true] %s50
      %56 = dma.hbm_to_vmem [thread:$0]  %s3, 256, %s51, [#allocation9], 128, 128, 8
    $region17: #{tpu_custom_call.1} parent=1 // pred_fallthru
      _
    // Predicated region
    $region18: #{tpu_custom_call.1} parent=1 // pred_check
      _
    $region19: #{tpu_custom_call.1} parent=1 // pred_check_branch
      %58 = sbr.rel (0) target = $region21
    $region20: #{tpu_custom_call.1} parent=1 // pred_region
      %59 = dma.done [#allocation3], 128
    $region21: #{tpu_custom_call.1} parent=1 // pred_fallthru
      _
    // Predicated region
    $region22: #{tpu_custom_call.1} parent=1 // pred_check
      _
    $region23: #{tpu_custom_call.1} parent=1 // pred_check_branch
      %61 = sbr.rel (0) target = $region25
    $region24: #{tpu_custom_call.1} parent=1 // pred_region
      %62 = dma.done [#allocation6], 16
    $region25: #{tpu_custom_call.1} parent=1 // pred_fallthru
      _
    // Predicated region
    $region26: #{tpu_custom_call.1} parent=1 // pred_check
      _
    $region27: #{tpu_custom_call.1} parent=1 // pred_check_branch
      %64 = sbr.rel (0) target = $region29
    $region28: #{tpu_custom_call.1} parent=1 // pred_region
      %65 = dma.done [#allocation6], 2048
    $region29: #{tpu_custom_call.1} parent=1 // pred_fallthru
      _
    // Predicated region
    $region30: #{tpu_custom_call.1} parent=1 // pred_check
      _
    $region31: #{tpu_custom_call.1} parent=1 // pred_check_branch
      %67 = sbr.rel (0) target = $region33
    $region32: #{tpu_custom_call.1} parent=1 // pred_region
      %68 = dma.done [#allocation9], 256
    $region33: #{tpu_custom_call.1} parent=1 // pred_fallthru
      _
    %v69 = vld [vmem:[#allocation2] sm:$0xff]
    %v70 = vld [vmem:[#allocation7] sm:$0xff]
    %v71 = vld [vmem:[#allocation7 + $0x8] sm:$0xff]
    %v72 = vld [vmem:[#allocation7 + $0x10] sm:$0xff]
    %v73 = vld [vmem:[#allocation7 + $0x18] sm:$0xff]
    %v74 = vld [vmem:[#allocation7 + $0x20] sm:$0xff]
    %v75 = vld [vmem:[#allocation7 + $0x28] sm:$0xff]
    %v76 = vld [vmem:[#allocation7 + $0x30] sm:$0xff]
    %v77 = vld [vmem:[#allocation7 + $0x38] sm:$0xff]
    %v78 = vld [vmem:[#allocation7 + $0x40] sm:$0xff]
    %v79 = vld [vmem:[#allocation7 + $0x48] sm:$0xff]
    %v80 = vld [vmem:[#allocation7 + $0x50] sm:$0xff]
    %v81 = vld [vmem:[#allocation7 + $0x58] sm:$0xff]
    %v82 = vld [vmem:[#allocation7 + $0x60] sm:$0xff]
    %v83 = vld [vmem:[#allocation7 + $0x68] sm:$0xff]
    %v84 = vld [vmem:[#allocation7 + $0x70] sm:$0xff]
    %v85 = vld [vmem:[#allocation7 + $0x78] sm:$0xff]
    %v86 = vld [vmem:[#allocation8] sm:$0xff]
    %v87 = vld [vmem:[#allocation8 + $0x8] sm:$0xff]
    %v88 = vmul.f32 %v69, %v69
    %89 = vmatprep.subr.mxu0 0.0
    %90 = vmatpush1.msra.mxu0 %v70
    %91 = vmatprep.subr.mxu0 0.0
    %92 = vmatpush1.msra.mxu0 %v71
    %93 = vmatprep.subr.mxu0 0.0
    %94 = vmatpush1.msra.mxu0 %v72
    %95 = vmatprep.subr.mxu0 0.0
    %96 = vmatpush1.msra.mxu0 %v73
    %97 = vmatprep.subr.mxu0 0.0
    %98 = vmatpush1.msra.mxu0 %v74
    %99 = vmatprep.subr.mxu0 0.0
    %100 = vmatpush1.msra.mxu0 %v75
    %101 = vmatprep.subr.mxu0 0.0
    %102 = vmatpush1.msra.mxu0 %v76
    %103 = vmatprep.subr.mxu0 0.0
    %104 = vmatpush1.msra.mxu0 %v77
    %105 = vmatprep.subr.mxu0 0.0
    %106 = vmatpush1.msra.mxu0 %v78
    %107 = vmatprep.subr.mxu0 0.0
    %108 = vmatpush1.msra.mxu0 %v79
    %109 = vmatprep.subr.mxu0 0.0
    %110 = vmatpush1.msra.mxu0 %v80
    %111 = vmatprep.subr.mxu0 0.0
    %112 = vmatpush1.msra.mxu0 %v81
    %113 = vmatprep.subr.mxu0 0.0
    %114 = vmatpush1.msra.mxu0 %v82
    %115 = vmatprep.subr.mxu0 0.0
    %116 = vmatpush1.msra.mxu0 %v83
    %117 = vmatprep.subr.mxu0 0.0
    %118 = vmatpush1.msra.mxu0 %v84
    %119 = vmatprep.subr.mxu0 0.0
    %120 = vmatpush1.msra.mxu0 %v85
    %121 = vmatprep.subr.mxu0 0.0
    %122 = vmatpush1.msra.mxu0 0.0
    %123 = vmatprep.subr.mxu0 0.0
    %124 = vmatpush1.msra.mxu0 0.0
    %125 = vmatprep.subr.mxu0 0.0
    %126 = vmatpush1.msra.mxu0 0.0
    %127 = vmatprep.subr.mxu0 0.0
    %128 = vmatpush1.msra.mxu0 0.0
    %129 = vmatprep.subr.mxu0 0.0
    %130 = vmatpush1.msra.mxu0 0.0
    %131 = vmatprep.subr.mxu0 0.0
    %132 = vmatpush1.msra.mxu0 0.0
    %133 = vmatprep.subr.mxu0 0.0
    %134 = vmatpush1.msra.mxu0 0.0
    %135 = vmatprep.subr.mxu0 0.0
    %136 = vmatpush1.msra.mxu0 0.0
    %137 = vmatprep.subr.mxu0 0.0
    %138 = vmatpush1.msra.mxu0 0.0
    %139 = vmatprep.subr.mxu0 0.0
    %140 = vmatpush1.msra.mxu0 0.0
    %141 = vmatprep.subr.mxu0 0.0
    %142 = vmatpush1.msra.mxu0 0.0
    %143 = vmatprep.subr.mxu0 0.0
    %144 = vmatpush1.msra.mxu0 0.0
    %145 = vmatprep.subr.mxu0 0.0
    %146 = vmatpush1.msra.mxu0 0.0
    %147 = vmatprep.subr.mxu0 0.0
    %148 = vmatpush1.msra.mxu0 0.0
    %149 = vmatprep.subr.mxu0 0.0
    %150 = vmatpush1.msra.mxu0 0.0
    %151 = vmatprep.subr.mxu0 0.0
    %152 = vmatpush1.msra.mxu0 0.0
    %153 = vmatprep.mubr.f32.mxu0 0.0
    %154 = vmatmul.mubr.f32.gmra.mrb[0].mxu0 %v88
    %v155 = vpop.f32.mrb[0].mxu0
    %v156 = vadd.f32 0.0, %v155
    %v157 = vpop.f32.mrb[0].mxu0
    %158 = vdwg.mxu0
    %v159 = vmul.f32 %v156, 0.125
    %v160 = vadd.f32 %v159, 1e-05
    %v161 = vrsqrt.pop %v160
    %vm162 = vcmask 130048
    %v164 = vsel %vm162, %v161, 0
    %166 = vmatprep.subr.mxu0 0.0
    %167 = vmatpush1.msra.mxu0 %v86
    %168 = vmatprep.subr.mxu0 0.0
    %169 = vmatpush1.msra.mxu0 %v87
    %170 = vmatprep.subr.mxu0 0.0
    %171 = vmatpush1.msra.mxu0 0.0
    %172 = vmatprep.subr.mxu0 0.0
    %173 = vmatpush1.msra.mxu0 0.0
    %174 = vmatprep.subr.mxu0 0.0
    %175 = vmatpush1.msra.mxu0 0.0
    %176 = vmatprep.subr.mxu0 0.0
    %177 = vmatpush1.msra.mxu0 0.0
    %178 = vmatprep.subr.mxu0 0.0
    %179 = vmatpush1.msra.mxu0 0.0
    %180 = vmatprep.subr.mxu0 0.0
    %181 = vmatpush1.msra.mxu0 0.0
    %182 = vmatprep.subr.mxu0 0.0
    %183 = vmatpush1.msra.mxu0 0.0
    %184 = vmatprep.subr.mxu0 0.0
    %185 = vmatpush1.msra.mxu0 0.0
    %186 = vmatprep.subr.mxu0 0.0
    %187 = vmatpush1.msra.mxu0 0.0
    %188 = vmatprep.subr.mxu0 0.0
    %189 = vmatpush1.msra.mxu0 0.0
    %190 = vmatprep.subr.mxu0 0.0
    %191 = vmatpush1.msra.mxu0 0.0
    %192 = vmatprep.subr.mxu0 0.0
    %193 = vmatpush1.msra.mxu0 0.0
    %194 = vmatprep.subr.mxu0 0.0
    %195 = vmatpush1.msra.mxu0 0.0
    %196 = vmatprep.subr.mxu0 0.0
    %197 = vmatpush1.msra.mxu0 0.0
    %198 = vmatprep.subr.mxu0 0.0
    %199 = vmatpush1.msra.mxu0 0.0
    %200 = vmatprep.subr.mxu0 0.0
    %201 = vmatpush1.msra.mxu0 0.0
    %202 = vmatprep.subr.mxu0 0.0
    %203 = vmatpush1.msra.mxu0 0.0
    %204 = vmatprep.subr.mxu0 0.0
    %205 = vmatpush1.msra.mxu0 0.0
    %206 = vmatprep.subr.mxu0 0.0
    %207 = vmatpush1.msra.mxu0 0.0
    %208 = vmatprep.subr.mxu0 0.0
    %209 = vmatpush1.msra.mxu0 0.0
    %210 = vmatprep.subr.mxu0 0.0
    %211 = vmatpush1.msra.mxu0 0.0
    %212 = vmatprep.subr.mxu0 0.0
    %213 = vmatpush1.msra.mxu0 0.0
    %214 = vmatprep.subr.mxu0 0.0
    %215 = vmatpush1.msra.mxu0 0.0
    %216 = vmatprep.subr.mxu0 0.0
    %217 = vmatpush1.msra.mxu0 0.0
    %218 = vmatprep.subr.mxu0 0.0
    %219 = vmatpush1.msra.mxu0 0.0
    %220 = vmatprep.subr.mxu0 0.0
    %221 = vmatpush1.msra.mxu0 0.0
    %222 = vmatprep.subr.mxu0 0.0
    %223 = vmatpush1.msra.mxu0 0.0
    %224 = vmatprep.subr.mxu0 0.0
    %225 = vmatpush1.msra.mxu0 0.0
    %226 = vmatprep.subr.mxu0 0.0
    %227 = vmatpush1.msra.mxu0 0.0
    %228 = vmatprep.subr.mxu0 0.0
    %229 = vmatpush1.msra.mxu0 0.0
    %230 = vmatprep.mubr.f32.mxu0 0.0
    %231 = vmatmul.mubr.f32.gmra.mrb[0].mxu0 %v164
    %v232 = vpop.f32.mrb[0].mxu0
    %v233 = vadd.f32 0.0, %v232
    %v234 = vpop.f32.mrb[0].mxu0
    %235 = vdwg.mxu0
    %v236 = vld [vmem:[#allocation5] sm:$0x1]
    %v237 = vmul.f32 %v69, %v233
    %v239 = vlaneseq
    %v240 = vshrl.u32 %v239, 7
    %v241 = vsub.s32 0, %v240
    %v242 = vrot.slane %v236, %v241
    %v244 = vmul.f32 %v237, %v242
    %245 = vst [vmem:[#allocation10] sm:$0xff] %v244
    // Predicated region
    $region34: #{tpu_custom_call.1} parent=1 // pred_check
      _
    $region35: #{tpu_custom_call.1} parent=1 // pred_check_branch
      %247 = sbr.rel (0) target = $region37
    $region36: #{tpu_custom_call.1} parent=1 // pred_region
      %s249 = ssub.s32 128, 128
      %250 = vsyncadd [#allocation4], %s249
      %s252 = sshll.u32 [#allocation10], 4
      %s253 = int_to_ptr.vmem [resolvable:$true] %s252
      %255 = dma.vmem_to_hbm [thread:$0]  %s253, 128, %s4, [#allocation4]
    $region37: #{tpu_custom_call.1} parent=1 // pred_fallthru
      _
    // Predicated region
    $region38: #{tpu_custom_call.1} parent=1 // pred_check
      _
    $region39: #{tpu_custom_call.1} parent=1 // pred_check_branch
      %257 = sbr.rel (0) target = $region41
    $region40: #{tpu_custom_call.1} parent=1 // pred_region
      %258 = dma.done [#allocation4], 128
    $region41: #{tpu_custom_call.1} parent=1 // pred_fallthru
      _
    %259 = vsyncpa [#allocation3], 1
    %260 = vsyncpa [#allocation6], 1
    %261 = vsyncpa [#allocation9], 1
    %262 = vsyncpa [#allocation4], 1

</llo_original>
